<compile_context>
chip_gen: v6e
topology: v6e:2x2x1
jax: 0.10.0
libtpu: 0.0.40
codegen_flags: <defaults>
</compile_context>

<pallas_src>
import functools

import jax
import jax.numpy as jnp
from jax import lax
from jax.experimental import pallas as pl
from jax.experimental.pallas import tpu as pltpu

EPS = 1e-5          # BatchNorm1d eps (PyTorch default)
NORM_EPS_SQ = 1e-24 # clamp on squared L2 norm (denominator >= 1e-12)
PAD = 128           # lane width


def _round_up(n, m):
    return (n + m - 1) // m * m


# --------------------------------------------------------------------------
# Kernel
# --------------------------------------------------------------------------
def _make_kernel(entries, n_enc_layers, n_dec_layers):
    """entries: tuple of (kind, row_offset, n_rows, n_cols_padded), in the exact
    order the forward pass consumes parameters."""

    def kernel(x_ref, p_ref, o_ref):
        idx = [0]

        def take():
            kind, r0, nrows, ncols = entries[idx[0]]
            idx[0] += 1
            if kind == "w":
                return p_ref[r0:r0 + nrows, 0:ncols]      # [in_p, out_p]
            return p_ref[r0:r0 + 1, 0:ncols]              # [1, d_p]

        x = x_ref[...]  # [batch, d0_p] f32

        # ---------------- encoder ----------------
        w = take()
        b = take()
        x = jnp.dot(x, w, preferred_element_type=jnp.float32) + b
        for _ in range(1, n_enc_layers):
            gamma = take()
            beta = take()
            # training-mode BN: per-batch mean / biased variance, fused to
            # a single per-feature scale + shift.
            mean = jnp.mean(x, axis=0, keepdims=True)
            ex2 = jnp.mean(x * x, axis=0, keepdims=True)
            var = jnp.maximum(ex2 - mean * mean, 0.0)
            inv = lax.rsqrt(var + EPS)
            scale = gamma * inv
            shift = beta - mean * scale
            x = jnp.maximum(x * scale + shift, 0.0)        # BN + ReLU fused
            w = take()
            b = take()
            x = jnp.dot(x, w, preferred_element_type=jnp.float32) + b

        # L2 normalize along features (rsqrt -> EUP; clamp avoids 0/0)
        x = x * lax.rsqrt(
            jnp.maximum(jnp.sum(x * x, axis=-1, keepdims=True), NORM_EPS_SQ))

        # ---------------- decoder ----------------
        w = take()
        b = take()
        x = jnp.dot(x, w, preferred_element_type=jnp.float32) + b
        for _ in range(1, n_dec_layers):
            x = jnp.maximum(x, 0.0)
            w = take()
            b = take()
            x = jnp.dot(x, w, preferred_element_type=jnp.float32) + b

        x = x * lax.rsqrt(
            jnp.maximum(jnp.sum(x * x, axis=-1, keepdims=True), NORM_EPS_SQ))

        o_ref[...] = x.astype(o_ref.dtype)

    return kernel


# --------------------------------------------------------------------------
# Parameter handling
# --------------------------------------------------------------------------
def init_params(key, encoder_hidden_dims, decoder_hidden_dims):
    """PyTorch-style params in kernel consumption order:
       weights [out, in], biases [out], BN gamma/beta [d]."""
    params = []

    def linear(key, d_in, d_out):
        kw, kb = jax.random.split(key)
        bound = 1.0 / jnp.sqrt(d_in)
        w = jax.random.uniform(kw, (d_out, d_in), jnp.float32, -bound, bound)
        b = jax.random.uniform(kb, (d_out,), jnp.float32, -bound, bound)
        return w, b

    keys = jax.random.split(
        key, (len(encoder_hidden_dims) - 1) + len(decoder_hidden_dims))
    ki = 0

    # encoder
    for i in range(1, len(encoder_hidden_dims)):
        if i > 1:
            d = encoder_hidden_dims[i - 1]
            params.append(("bn_gamma", jnp.ones((d,), jnp.float32)))
            params.append(("bn_beta", jnp.zeros((d,), jnp.float32)))
        w, b = linear(keys[ki], encoder_hidden_dims[i - 1], encoder_hidden_dims[i])
        ki += 1
        params.append(("w", w))
        params.append(("b", b))

    # decoder
    prev = encoder_hidden_dims[-1]
    for i in range(len(decoder_hidden_dims)):
        w, b = linear(keys[ki], prev, decoder_hidden_dims[i])
        ki += 1
        params.append(("w", w))
        params.append(("b", b))
        prev = decoder_hidden_dims[i]

    return params


def pack_params(params):
    """Pack all params into one zero-padded f32 buffer [rows, dmax].

    Weights -> transposed to [in, out], zero-padded to [round128(in), dmax]
               (meaningful cols 0:round128(out)).
    Vectors -> one 8-row block each, data in row 0, cols 0:round128(d).
    Returns (packed_buffer, entries) with entries = (kind, row0, rows, cols_p).
    """
    dmax = 0
    for kind, p in params:
        if kind == "w":
            dmax = max(dmax, _round_up(p.shape[0], PAD))
        else:
            dmax = max(dmax, _round_up(p.shape[0], PAD))

    blocks = []
    entries = []
    row = 0
    for kind, p in params:
        if kind == "w":
            d_out, d_in = p.shape
            in_p = _round_up(d_in, PAD)
            out_p = _round_up(d_out, PAD)
            blk = jnp.zeros((in_p, dmax), jnp.float32)
            blk = blk.at[:d_in, :d_out].set(jnp.transpose(p))
            entries.append(("w", row, in_p, out_p))
            blocks.append(blk)
            row += in_p
        else:
            d = p.shape[0]
            d_p = _round_up(d, PAD)
            blk = jnp.zeros((8, dmax), jnp.float32)
            blk = blk.at[0, :d].set(p)
            entries.append((kind, row, 1, d_p))
            blocks.append(blk)
            row += 8

    packed = jnp.concatenate(blocks, axis=0)
    return packed, tuple(entries)


# --------------------------------------------------------------------------
# Wrapper
# --------------------------------------------------------------------------
@functools.partial(jax.jit, static_argnums=(2, 3, 4, 5))
def autoencoder_forward(x, packed, entries, n_enc_layers, n_dec_layers, out_dim):
    batch, d_in = x.shape
    d_in_p = _round_up(d_in, PAD)
    out_p = entries[-1][3]  # padded width of final bias == final output width

    x_p = jnp.zeros((batch, d_in_p), jnp.float32).at[:, :d_in].set(
        x.astype(jnp.float32))

    kernel = _make_kernel(entries, n_enc_layers, n_dec_layers)
    vmem_spec = pl.BlockSpec(memory_space=pltpu.MemorySpace.VMEM)

    y_p = pl.pallas_call(
        kernel,
        out_shape=jax.ShapeDtypeStruct((batch, out_p), jnp.float32),
        in_specs=[vmem_spec, vmem_spec],
        out_specs=vmem_spec,
    )(x_p, packed)

    return y_p[:, :out_dim]


# --------------------------------------------------------------------------
# Pure-JAX reference (replicates the PyTorch forward, training-mode BN)
# --------------------------------------------------------------------------
def reference_forward(x, params, n_enc_layers, n_dec_layers):
    it = iter(params)

    def nxt():
        return next(it)[1]

    w, b = nxt(), nxt()
    x = x @ w.T + b
    for _ in range(1, n_enc_layers):
        g, bt = nxt(), nxt()
        mean = jnp.mean(x, axis=0, keepdims=True)
        var = jnp.mean((x - mean) ** 2, axis=0, keepdims=True)
        x = (x - mean) / jnp.sqrt(var + EPS) * g + bt
        x = jnp.maximum(x, 0.0)
        w, b = nxt(), nxt()
        x = x @ w.T + b
    x = x / jnp.linalg.norm(x, axis=-1, keepdims=True)

    w, b = nxt(), nxt()
    x = x @ w.T + b
    for _ in range(1, n_dec_layers):
        x = jnp.maximum(x, 0.0)
        w, b = nxt(), nxt()
        x = x @ w.T + b
    x = x / jnp.linalg.norm(x, axis=-1, keepdims=True)
    return x


if __name__ == "__main__":
    # Same architecture as: Autoencoder([16, 32, 8], [32, 16])
    encoder_hidden_dims = [16, 32, 8]   # Linear(16,32), BN(32), ReLU, Linear(32,8)
    decoder_hidden_dims = [32, 16]      # Linear(8,32), ReLU, Linear(32,16)
    batch = 8

    key = jax.random.PRNGKey(0)
    k_x, k_p = jax.random.split(key)
    x = jax.random.normal(k_x, (batch, encoder_hidden_dims[0]), jnp.float32)

    params = init_params(k_p, encoder_hidden_dims, decoder_hidden_dims)
    packed, entries = pack_params(params)

    n_enc_layers = len(encoder_hidden_dims) - 1
    n_dec_layers = len(decoder_hidden_dims)
    out_dim = decoder_hidden_dims[-1]

    out = autoencoder_forward(x, packed, entries, n_enc_layers, n_dec_layers,
                              out_dim)
    out = jax.block_until_ready(out)

    ref = reference_forward(x, params, n_enc_layers, n_dec_layers)
    assert out.shape == (batch, out_dim)
    assert jnp.allclose(out, ref, atol=1e-5, rtol=1e-4), "mismatch vs JAX reference"

    print("KERNEL_OK")
</pallas_src>

<mosaic_0001>
module attributes {stable_mosaic.version = 11 : i64} {
  func.func @kernel(%arg0: memref<8x128xf32, #tpu.memory_space<vmem>>, %arg1: memref<560x128xf32, #tpu.memory_space<vmem>>, %arg2: memref<8x128xf32, #tpu.memory_space<vmem>>) attributes {dimension_semantics = [], scalar_prefetch = 0 : i64, scratch_operands = 0 : i64, tpu.core_type = #tpu.core_type<tc>} {
    %c0 = arith.constant 0 : index
    %c0_0 = arith.constant 0 : index
    %0 = vector.load %arg0[%c0, %c0_0] : memref<8x128xf32, #tpu.memory_space<vmem>>, vector<8x128xf32>
    %c0_1 = arith.constant 0 : index
    %c0_2 = arith.constant 0 : index
    %1 = vector.load %arg1[%c0_1, %c0_2] : memref<560x128xf32, #tpu.memory_space<vmem>>, vector<128x128xf32>
    %c128 = arith.constant 128 : index
    %c0_3 = arith.constant 0 : index
    %2 = vector.load %arg1[%c128, %c0_3] : memref<560x128xf32, #tpu.memory_space<vmem>>, vector<1x128xf32>
    %cst = arith.constant dense<0.000000e+00> : vector<8x128xf32>
    %3 = tpu.matmul %0, %1, %cst {dimension_numbers = #tpu.dot_dimension_numbers<[1], [0], [0], [1], [0, 0, 1, 1], [], []>} : vector<8x128xf32>, vector<128x128xf32>, vector<8x128xf32> -> vector<8x128xf32>
    %4 = vector.broadcast %2 : vector<1x128xf32> to vector<8x128xf32>
    %5 = arith.addf %3, %4 : vector<8x128xf32>
    %c136 = arith.constant 136 : index
    %c0_4 = arith.constant 0 : index
    %6 = vector.load %arg1[%c136, %c0_4] : memref<560x128xf32, #tpu.memory_space<vmem>>, vector<1x128xf32>
    %c144 = arith.constant 144 : index
    %c0_5 = arith.constant 0 : index
    %7 = vector.load %arg1[%c144, %c0_5] : memref<560x128xf32, #tpu.memory_space<vmem>>, vector<1x128xf32>
    %cst_6 = arith.constant dense<0.000000e+00> : vector<128xf32>
    %8 = vector.multi_reduction <add>, %5, %cst_6 [0] : vector<8x128xf32> to vector<128xf32>
    %9 = vector.shape_cast %8 : vector<128xf32> to vector<1x128xf32>
    %cst_7 = arith.constant 8.000000e+00 : f32
    %10 = vector.broadcast %cst_7 : f32 to vector<1x128xf32>
    %11 = arith.divf %9, %10 : vector<1x128xf32>
    %12 = arith.mulf %5, %5 : vector<8x128xf32>
    %cst_8 = arith.constant dense<0.000000e+00> : vector<128xf32>
    %13 = vector.multi_reduction <add>, %12, %cst_8 [0] : vector<8x128xf32> to vector<128xf32>
    %14 = vector.shape_cast %13 : vector<128xf32> to vector<1x128xf32>
    %cst_9 = arith.constant 8.000000e+00 : f32
    %15 = vector.broadcast %cst_9 : f32 to vector<1x128xf32>
    %16 = arith.divf %14, %15 : vector<1x128xf32>
    %17 = arith.mulf %11, %11 : vector<1x128xf32>
    %18 = arith.subf %16, %17 : vector<1x128xf32>
    %cst_10 = arith.constant 0.000000e+00 : f32
    %19 = vector.broadcast %cst_10 : f32 to vector<1x128xf32>
    %20 = arith.maximumf %18, %19 : vector<1x128xf32>
    %cst_11 = arith.constant 9.99999974E-6 : f32
    %21 = vector.broadcast %cst_11 : f32 to vector<1x128xf32>
    %22 = arith.addf %20, %21 : vector<1x128xf32>
    %23 = math.rsqrt %22 : vector<1x128xf32>
    %24 = arith.mulf %6, %23 : vector<1x128xf32>
    %25 = arith.mulf %11, %24 : vector<1x128xf32>
    %26 = arith.subf %7, %25 : vector<1x128xf32>
    %27 = vector.broadcast %24 : vector<1x128xf32> to vector<8x128xf32>
    %28 = arith.mulf %5, %27 : vector<8x128xf32>
    %29 = vector.broadcast %26 : vector<1x128xf32> to vector<8x128xf32>
    %30 = arith.addf %28, %29 : vector<8x128xf32>
    %cst_12 = arith.constant 0.000000e+00 : f32
    %31 = vector.broadcast %cst_12 : f32 to vector<8x128xf32>
    %32 = arith.maximumf %30, %31 : vector<8x128xf32>
    %c152 = arith.constant 152 : index
    %c0_13 = arith.constant 0 : index
    %33 = vector.load %arg1[%c152, %c0_13] : memref<560x128xf32, #tpu.memory_space<vmem>>, vector<128x128xf32>
    %c280 = arith.constant 280 : index
    %c0_14 = arith.constant 0 : index
    %34 = vector.load %arg1[%c280, %c0_14] : memref<560x128xf32, #tpu.memory_space<vmem>>, vector<1x128xf32>
    %cst_15 = arith.constant dense<0.000000e+00> : vector<8x128xf32>
    %35 = tpu.matmul %32, %33, %cst_15 {dimension_numbers = #tpu.dot_dimension_numbers<[1], [0], [0], [1], [0, 0, 1, 1], [], []>} : vector<8x128xf32>, vector<128x128xf32>, vector<8x128xf32> -> vector<8x128xf32>
    %36 = vector.broadcast %34 : vector<1x128xf32> to vector<8x128xf32>
    %37 = arith.addf %35, %36 : vector<8x128xf32>
    %38 = arith.mulf %37, %37 : vector<8x128xf32>
    %cst_16 = arith.constant dense<0.000000e+00> : vector<8xf32>
    %39 = vector.multi_reduction <add>, %38, %cst_16 [1] : vector<8x128xf32> to vector<8xf32>
    %40 = vector.shape_cast %39 : vector<8xf32> to vector<8x1xf32>
    %cst_17 = arith.constant 1.000000e-24 : f32
    %41 = vector.broadcast %cst_17 : f32 to vector<8x1xf32>
    %42 = arith.maximumf %40, %41 : vector<8x1xf32>
    %43 = math.rsqrt %42 : vector<8x1xf32>
    %44 = vector.broadcast %43 : vector<8x1xf32> to vector<8x128xf32>
    %45 = arith.mulf %37, %44 : vector<8x128xf32>
    %c288 = arith.constant 288 : index
    %c0_18 = arith.constant 0 : index
    %46 = vector.load %arg1[%c288, %c0_18] : memref<560x128xf32, #tpu.memory_space<vmem>>, vector<128x128xf32>
    %c416 = arith.constant 416 : index
    %c0_19 = arith.constant 0 : index
    %47 = vector.load %arg1[%c416, %c0_19] : memref<560x128xf32, #tpu.memory_space<vmem>>, vector<1x128xf32>
    %cst_20 = arith.constant dense<0.000000e+00> : vector<8x128xf32>
    %48 = tpu.matmul %45, %46, %cst_20 {dimension_numbers = #tpu.dot_dimension_numbers<[1], [0], [0], [1], [0, 0, 1, 1], [], []>} : vector<8x128xf32>, vector<128x128xf32>, vector<8x128xf32> -> vector<8x128xf32>
    %49 = vector.broadcast %47 : vector<1x128xf32> to vector<8x128xf32>
    %50 = arith.addf %48, %49 : vector<8x128xf32>
    %cst_21 = arith.constant 0.000000e+00 : f32
    %51 = vector.broadcast %cst_21 : f32 to vector<8x128xf32>
    %52 = arith.maximumf %50, %51 : vector<8x128xf32>
    %c424 = arith.constant 424 : index
    %c0_22 = arith.constant 0 : index
    %53 = vector.load %arg1[%c424, %c0_22] : memref<560x128xf32, #tpu.memory_space<vmem>>, vector<128x128xf32>
    %c552 = arith.constant 552 : index
    %c0_23 = arith.constant 0 : index
    %54 = vector.load %arg1[%c552, %c0_23] : memref<560x128xf32, #tpu.memory_space<vmem>>, vector<1x128xf32>
    %cst_24 = arith.constant dense<0.000000e+00> : vector<8x128xf32>
    %55 = tpu.matmul %52, %53, %cst_24 {dimension_numbers = #tpu.dot_dimension_numbers<[1], [0], [0], [1], [0, 0, 1, 1], [], []>} : vector<8x128xf32>, vector<128x128xf32>, vector<8x128xf32> -> vector<8x128xf32>
    %56 = vector.broadcast %54 : vector<1x128xf32> to vector<8x128xf32>
    %57 = arith.addf %55, %56 : vector<8x128xf32>
    %58 = arith.mulf %57, %57 : vector<8x128xf32>
    %cst_25 = arith.constant dense<0.000000e+00> : vector<8xf32>
    %59 = vector.multi_reduction <add>, %58, %cst_25 [1] : vector<8x128xf32> to vector<8xf32>
    %60 = vector.shape_cast %59 : vector<8xf32> to vector<8x1xf32>
    %cst_26 = arith.constant 1.000000e-24 : f32
    %61 = vector.broadcast %cst_26 : f32 to vector<8x1xf32>
    %62 = arith.maximumf %60, %61 : vector<8x1xf32>
    %63 = math.rsqrt %62 : vector<8x1xf32>
    %64 = vector.broadcast %63 : vector<8x1xf32> to vector<8x128xf32>
    %65 = arith.mulf %57, %64 : vector<8x128xf32>
    %c0_27 = arith.constant 0 : index
    %c0_28 = arith.constant 0 : index
    %66 = vector.load %arg2[%c0_27, %c0_28] : memref<8x128xf32, #tpu.memory_space<vmem>>, vector<8x128xf32>
    tpu.vector_store %arg2[%c0_27, %c0_28], %65 {strides = array<i32>} : memref<8x128xf32, #tpu.memory_space<vmem>>, vector<8x128xf32>,
    return
  }
}

</mosaic_0001>

<llo_original>
// kernel: autoencoder_forward.1
$region0: #{autoencoder_forward.1}
  #allocation0 [shape = 'u32[]', space=smem, size = 0x4, offset = 0x4, fixed_abs, tag = 'smem constant byte address 0x4 - core index']
  #allocation1 [shape = 'u32[144,128]{1,0:T(1,128)}', space=vmem, size = 0x12000, scoped, tag = 'internal scratch']
  %s0 = inlined_call_operand.vmem [shape: f32[8,128], index: 0, kind: input, shape index: {}]
  %s1 = inlined_call_operand.hbm [shape: f32[560,128], index: 1, kind: input, shape index: {}]
  %s2 = inlined_call_operand.hbm [shape: f32[8,128], index: 2, kind: output, shape index: {}]
  %s3 = sld [smem:[#allocation0]]
  $region22: #{autoencoder_forward.1} parent=0
    _
  %s5 = ssub.s32 1, %s3
  %s6 = scalar_select 0, %s5, %s3
  $region1: #{autoencoder_forward.1} parent=0
    #allocation2 [shape = 'u8[286720]{0}', space=vmem, size = 0x46000, scoped, tag = 'input window, operand 1, single buffered']
    #allocation3 [shape = 's32[1]{0}', space=sflag, size = 0x4, scoped, tag = 'scoped memory for autoencoder_forward.1']
    #allocation4 [shape = 's32[1]{0}', space=sflag, size = 0x4, scoped, tag = 'scoped memory for autoencoder_forward.1']
    #allocation5 [shape = 'u8[4096]{0}', space=vmem, size = 0x1000, scoped, tag = 'output window, operand 0, single buffered']
    %7 = vsyncpa [#allocation3], 0
    %8 = vsyncpa [#allocation4], 0
    // Predicated region
    $region2: #{autoencoder_forward.1} parent=1 // pred_check
      _
    $region3: #{autoencoder_forward.1} parent=1 // pred_check_branch
      %10 = sbr.rel (0) target = $region5
    $region4: #{autoencoder_forward.1} parent=1 // pred_region
      _
    $region5: #{autoencoder_forward.1} parent=1 // pred_fallthru
      _
    // Predicated region
    $region6: #{autoencoder_forward.1} parent=1 // pred_check
      _
    $region7: #{autoencoder_forward.1} parent=1 // pred_check_branch
      %12 = sbr.rel (0) target = $region9
    $region8: #{autoencoder_forward.1} parent=1 // pred_region
      %s14 = ssub.s32 8960, 8960
      %15 = vsyncadd [#allocation3], %s14
      %s16 = sshll.u32 [#allocation2], 4
      %s17 = int_to_ptr.vmem [resolvable:$true] %s16
      %22 = dma.hbm_to_vmem [thread:$0]  %s1, 8960, %s17, [#allocation3], 128, 128, 8
    $region9: #{autoencoder_forward.1} parent=1 // pred_fallthru
      _
    // Predicated region
    $region10: #{autoencoder_forward.1} parent=1 // pred_check
      _
    $region11: #{autoencoder_forward.1} parent=1 // pred_check_branch
      %24 = sbr.rel (0) target = $region13
    $region12: #{autoencoder_forward.1} parent=1 // pred_region
      %25 = dma.done [#allocation3], 8960
    $region13: #{autoencoder_forward.1} parent=1 // pred_fallthru
      _
    %v26 = vld [vmem:[%s0] sm:$0xff]
    %v27 = vld [vmem:[#allocation2] sm:$0xff]
    %v28 = vld [vmem:[#allocation2 + $0x8] sm:$0xff]
    %v29 = vld [vmem:[#allocation2 + $0x10] sm:$0xff]
    %v30 = vld [vmem:[#allocation2 + $0x18] sm:$0xff]
    %v31 = vld [vmem:[#allocation2 + $0x20] sm:$0xff]
    %v32 = vld [vmem:[#allocation2 + $0x28] sm:$0xff]
    %v33 = vld [vmem:[#allocation2 + $0x30] sm:$0xff]
    %v34 = vld [vmem:[#allocation2 + $0x38] sm:$0xff]
    %v35 = vld [vmem:[#allocation2 + $0x40] sm:$0xff]
    %v36 = vld [vmem:[#allocation2 + $0x48] sm:$0xff]
    %v37 = vld [vmem:[#allocation2 + $0x50] sm:$0xff]
    %v38 = vld [vmem:[#allocation2 + $0x58] sm:$0xff]
    %v39 = vld [vmem:[#allocation2 + $0x60] sm:$0xff]
    %v40 = vld [vmem:[#allocation2 + $0x68] sm:$0xff]
    %v41 = vld [vmem:[#allocation2 + $0x70] sm:$0xff]
    %v42 = vld [vmem:[#allocation2 + $0x78] sm:$0xff]
    %v43 = vld [vmem:[#allocation2 + $0x80] sm:$0x1]
    %v44 = vlaneseq
    %v45 = vshrl.u32 %v44, 7
    %v46 = vsub.s32 0, %v45
    %v47 = vrot.slane %v43, %v46
    %48 = vmatprep.subr.mxu0 0.0
    %49 = vmatpush1.msra.mxu0 %v42
    %50 = vmatprep.subr.mxu0 0.0
    %51 = vmatpush1.msra.mxu0 %v41
    %52 = vmatprep.subr.mxu0 0.0
    %53 = vmatpush1.msra.mxu0 %v40
    %54 = vmatprep.subr.mxu0 0.0
    %55 = vmatpush1.msra.mxu0 %v39
    %56 = vmatprep.subr.mxu0 0.0
    %57 = vmatpush1.msra.mxu0 %v38
    %58 = vmatprep.subr.mxu0 0.0
    %59 = vmatpush1.msra.mxu0 %v37
    %60 = vmatprep.subr.mxu0 0.0
    %61 = vmatpush1.msra.mxu0 %v36
    %62 = vmatprep.subr.mxu0 0.0
    %63 = vmatpush1.msra.mxu0 %v35
    %64 = vmatprep.subr.mxu0 0.0
    %65 = vmatpush1.msra.mxu0 %v34
    %66 = vmatprep.subr.mxu0 0.0
    %67 = vmatpush1.msra.mxu0 %v33
    %68 = vmatprep.subr.mxu0 0.0
    %69 = vmatpush1.msra.mxu0 %v32
    %70 = vmatprep.subr.mxu0 0.0
    %71 = vmatpush1.msra.mxu0 %v31
    %72 = vmatprep.subr.mxu0 0.0
    %73 = vmatpush1.msra.mxu0 %v30
    %74 = vmatprep.subr.mxu0 0.0
    %75 = vmatpush1.msra.mxu0 %v29
    %76 = vmatprep.subr.mxu0 0.0
    %77 = vmatpush1.msra.mxu0 %v28
    %78 = vmatprep.subr.mxu0 0.0
    %79 = vmatpush1.msra.mxu0 %v27
    %80 = vmatprep.subr.mxu0 0.0
    %81 = vmatpush2.msra.mxu0 0.0
    %82 = vmatprep.subr.mxu0 0.0
    %83 = vmatpush2.msra.mxu0 0.0
    %84 = vmatprep.subr.mxu0 0.0
    %85 = vmatpush2.msra.mxu0 0.0
    %86 = vmatprep.subr.mxu0 0.0
    %87 = vmatpush2.msra.mxu0 0.0
    %88 = vmatprep.subr.mxu0 0.0
    %89 = vmatpush2.msra.mxu0 0.0
    %90 = vmatprep.subr.mxu0 0.0
    %91 = vmatpush2.msra.mxu0 0.0
    %92 = vmatprep.subr.mxu0 0.0
    %93 = vmatpush2.msra.mxu0 0.0
    %94 = vmatprep.subr.mxu0 0.0
    %95 = vmatpush2.msra.mxu0 0.0
    %96 = vmatprep.subr.mxu0 0.0
    %97 = vmatpush2.msra.mxu0 0.0
    %98 = vmatprep.subr.mxu0 0.0
    %99 = vmatpush2.msra.mxu0 0.0
    %100 = vmatprep.subr.mxu0 0.0
    %101 = vmatpush2.msra.mxu0 0.0
    %102 = vmatprep.subr.mxu0 0.0
    %103 = vmatpush2.msra.mxu0 0.0
    %104 = vmatprep.subr.mxu0 0.0
    %105 = vmatpush2.msra.mxu0 0.0
    %106 = vmatprep.subr.mxu0 0.0
    %107 = vmatpush2.msra.mxu0 0.0
    %108 = vmatprep.subr.mxu0 0.0
    %109 = vmatpush2.msra.mxu0 0.0
    %110 = vmatprep.subr.mxu0 0.0
    %111 = vmatpush2.msra.mxu0 0.0
    %112 = vmatprep.mubr.f32.mxu0 0.0
    %113 = vmatmul.mubr.f32.gmra.mxu0 %v26
    %v114 = vpop.f32.mrf.mxu0
    %v115 = vadd.f32 %v47, %v114
    %v116 = vpop.f32.mrf.mxu0
    %117 = vdwg.mxu0
    %v118 = vld [vmem:[#allocation2 + $0x88] sm:$0x1]
    %v119 = vld [vmem:[#allocation2 + $0x90] sm:$0x1]
    %v120 = vrot.slane %v115, 4
    %v121 = vadd.f32 %v115, %v120
    %v122 = vrot.slane %v121, 2
    %v123 = vadd.f32 %v121, %v122
    %v124 = vrot.slane %v123, 1
    %v125 = vadd.f32 %v123, %v124
    %v126 = vrcp.pop 8.0
    %v127 = vmul.f32 %v125, %v126
    %v128 = vmul.f32 %v115, %v115
    %v129 = vrot.slane %v128, 4
    %v130 = vadd.f32 %v128, %v129
    %v131 = vrot.slane %v130, 2
    %v132 = vadd.f32 %v130, %v131
    %v133 = vrot.slane %v132, 1
    %v134 = vadd.f32 %v132, %v133
    %v135 = vmul.f32 %v134, %v126
    %v136 = vmul.f32 %v127, %v127
    %v137 = vsub.f32 %v135, %v136
    %v138 = vmax.f32 %v137, 0.0
    %v139 = vadd.f32 %v138, 1e-05
    %v140 = vrsqrt.pop %v139
    %v141 = vmul.f32 %v118, %v140
    %v142 = vmul.f32 %v127, %v141
    %v143 = vsub.f32 %v119, %v142
    %v144 = vlaneseq
    %v145 = vshrl.u32 %v144, 7
    %v146 = vsub.s32 0, %v145
    %v147 = vrot.slane %v141, %v146
    %v148 = vmul.f32 %v115, %v147
    %v149 = vlaneseq
    %v150 = vshrl.u32 %v149, 7
    %v151 = vsub.s32 0, %v150
    %v152 = vrot.slane %v143, %v151
    %v153 = vadd.f32 %v148, %v152
    %v154 = vmax.f32 %v153, 0.0
    %v155 = vld [vmem:[#allocation2 + $0x98] sm:$0xff]
    %v156 = vld [vmem:[#allocation2 + $0xa0] sm:$0xff]
    %v157 = vld [vmem:[#allocation2 + $0xa8] sm:$0xff]
    %v158 = vld [vmem:[#allocation2 + $0xb0] sm:$0xff]
    %v159 = vld [vmem:[#allocation2 + $0xb8] sm:$0xff]
    %v160 = vld [vmem:[#allocation2 + $0xc0] sm:$0xff]
    %v161 = vld [vmem:[#allocation2 + $0xc8] sm:$0xff]
    %v162 = vld [vmem:[#allocation2 + $0xd0] sm:$0xff]
    %v163 = vld [vmem:[#allocation2 + $0xd8] sm:$0xff]
    %v164 = vld [vmem:[#allocation2 + $0xe0] sm:$0xff]
    %v165 = vld [vmem:[#allocation2 + $0xe8] sm:$0xff]
    %v166 = vld [vmem:[#allocation2 + $0xf0] sm:$0xff]
    %v167 = vld [vmem:[#allocation2 + $0xf8] sm:$0xff]
    %v168 = vld [vmem:[#allocation2 + $0x100] sm:$0xff]
    %v169 = vld [vmem:[#allocation2 + $0x108] sm:$0xff]
    %v170 = vld [vmem:[#allocation2 + $0x110] sm:$0xff]
    %v171 = vld [vmem:[#allocation2 + $0x118] sm:$0x1]
    %v172 = vlaneseq
    %v173 = vshrl.u32 %v172, 7
    %v174 = vsub.s32 0, %v173
    %v175 = vrot.slane %v171, %v174
    %176 = vmatprep.subr.mxu0 0.0
    %177 = vmatpush1.msra.mxu0 %v170
    %178 = vmatprep.subr.mxu0 0.0
    %179 = vmatpush1.msra.mxu0 %v169
    %180 = vmatprep.subr.mxu0 0.0
    %181 = vmatpush1.msra.mxu0 %v168
    %182 = vmatprep.subr.mxu0 0.0
    %183 = vmatpush1.msra.mxu0 %v167
    %184 = vmatprep.subr.mxu0 0.0
    %185 = vmatpush1.msra.mxu0 %v166
    %186 = vmatprep.subr.mxu0 0.0
    %187 = vmatpush1.msra.mxu0 %v165
    %188 = vmatprep.subr.mxu0 0.0
    %189 = vmatpush1.msra.mxu0 %v164
    %190 = vmatprep.subr.mxu0 0.0
    %191 = vmatpush1.msra.mxu0 %v163
    %192 = vmatprep.subr.mxu0 0.0
    %193 = vmatpush1.msra.mxu0 %v162
    %194 = vmatprep.subr.mxu0 0.0
    %195 = vmatpush1.msra.mxu0 %v161
    %196 = vmatprep.subr.mxu0 0.0
    %197 = vmatpush1.msra.mxu0 %v160
    %198 = vmatprep.subr.mxu0 0.0
    %199 = vmatpush1.msra.mxu0 %v159
    %200 = vmatprep.subr.mxu0 0.0
    %201 = vmatpush1.msra.mxu0 %v158
    %202 = vmatprep.subr.mxu0 0.0
    %203 = vmatpush1.msra.mxu0 %v157
    %204 = vmatprep.subr.mxu0 0.0
    %205 = vmatpush1.msra.mxu0 %v156
    %206 = vmatprep.subr.mxu0 0.0
    %207 = vmatpush1.msra.mxu0 %v155
    %208 = vmatprep.subr.mxu0 0.0
    %209 = vmatpush2.msra.mxu0 0.0
    %210 = vmatprep.subr.mxu0 0.0
    %211 = vmatpush2.msra.mxu0 0.0
    %212 = vmatprep.subr.mxu0 0.0
    %213 = vmatpush2.msra.mxu0 0.0
    %214 = vmatprep.subr.mxu0 0.0
    %215 = vmatpush2.msra.mxu0 0.0
    %216 = vmatprep.subr.mxu0 0.0
    %217 = vmatpush2.msra.mxu0 0.0
    %218 = vmatprep.subr.mxu0 0.0
    %219 = vmatpush2.msra.mxu0 0.0
    %220 = vmatprep.subr.mxu0 0.0
    %221 = vmatpush2.msra.mxu0 0.0
    %222 = vmatprep.subr.mxu0 0.0
    %223 = vmatpush2.msra.mxu0 0.0
    %224 = vmatprep.subr.mxu0 0.0
    %225 = vmatpush2.msra.mxu0 0.0
    %226 = vmatprep.subr.mxu0 0.0
    %227 = vmatpush2.msra.mxu0 0.0
    %228 = vmatprep.subr.mxu0 0.0
    %229 = vmatpush2.msra.mxu0 0.0
    %230 = vmatprep.subr.mxu0 0.0
    %231 = vmatpush2.msra.mxu0 0.0
    %232 = vmatprep.subr.mxu0 0.0
    %233 = vmatpush2.msra.mxu0 0.0
    %234 = vmatprep.subr.mxu0 0.0
    %235 = vmatpush2.msra.mxu0 0.0
    %236 = vmatprep.subr.mxu0 0.0
    %237 = vmatpush2.msra.mxu0 0.0
    %238 = vmatprep.subr.mxu0 0.0
    %239 = vmatpush2.msra.mxu0 0.0
    %240 = vmatprep.mubr.f32.mxu0 0.0
    %241 = vmatmul.mubr.f32.gmra.mxu0 %v154
    %v242 = vpop.f32.mrf.mxu0
    %v243 = vadd.f32 %v175, %v242
    %v244 = vpop.f32.mrf.mxu0
    %245 = vdwg.mxu0
    %v246 = vmul.f32 %v243, %v243
    %247 = vadd.xlane.f32.xlu0 %v246
    %v248 = vpop.xlane.xlu0 %247
    %v249 = vmax.f32 %v248, 1e-24
    %v250 = vrsqrt.pop %v249
    %v251 = vmul.f32 %v243, %v250
    %v252 = vld [vmem:[#allocation2 + $0x120] sm:$0xff]
    %v253 = vld [vmem:[#allocation2 + $0x128] sm:$0xff]
    %v254 = vld [vmem:[#allocation2 + $0x130] sm:$0xff]
    %v255 = vld [vmem:[#allocation2 + $0x138] sm:$0xff]
    %v256 = vld [vmem:[#allocation2 + $0x140] sm:$0xff]
    %v257 = vld [vmem:[#allocation2 + $0x148] sm:$0xff]
    %v258 = vld [vmem:[#allocation2 + $0x150] sm:$0xff]
    %v259 = vld [vmem:[#allocation2 + $0x158] sm:$0xff]
    %v260 = vld [vmem:[#allocation2 + $0x160] sm:$0xff]
    %v261 = vld [vmem:[#allocation2 + $0x168] sm:$0xff]
    %v262 = vld [vmem:[#allocation2 + $0x170] sm:$0xff]
    %v263 = vld [vmem:[#allocation2 + $0x178] sm:$0xff]
    %v264 = vld [vmem:[#allocation2 + $0x180] sm:$0xff]
    %v265 = vld [vmem:[#allocation2 + $0x188] sm:$0xff]
    %v266 = vld [vmem:[#allocation2 + $0x190] sm:$0xff]
    %v267 = vld [vmem:[#allocation2 + $0x198] sm:$0xff]
    %v268 = vld [vmem:[#allocation2 + $0x1a0] sm:$0x1]
    %v269 = vlaneseq
    %v270 = vshrl.u32 %v269, 7
    %v271 = vsub.s32 0, %v270
    %v272 = vrot.slane %v268, %v271
    %273 = vmatprep.subr.mxu0 0.0
    %274 = vmatpush1.msra.mxu0 %v267
    %275 = vmatprep.subr.mxu0 0.0
    %276 = vmatpush1.msra.mxu0 %v266
    %277 = vmatprep.subr.mxu0 0.0
    %278 = vmatpush1.msra.mxu0 %v265
    %279 = vmatprep.subr.mxu0 0.0
    %280 = vmatpush1.msra.mxu0 %v264
    %281 = vmatprep.subr.mxu0 0.0
    %282 = vmatpush1.msra.mxu0 %v263
    %283 = vmatprep.subr.mxu0 0.0
    %284 = vmatpush1.msra.mxu0 %v262
    %285 = vmatprep.subr.mxu0 0.0
    %286 = vmatpush1.msra.mxu0 %v261
    %287 = vmatprep.subr.mxu0 0.0
    %288 = vmatpush1.msra.mxu0 %v260
    %289 = vmatprep.subr.mxu0 0.0
    %290 = vmatpush1.msra.mxu0 %v259
    %291 = vmatprep.subr.mxu0 0.0
    %292 = vmatpush1.msra.mxu0 %v258
    %293 = vmatprep.subr.mxu0 0.0
    %294 = vmatpush1.msra.mxu0 %v257
    %295 = vmatprep.subr.mxu0 0.0
    %296 = vmatpush1.msra.mxu0 %v256
    %297 = vmatprep.subr.mxu0 0.0
    %298 = vmatpush1.msra.mxu0 %v255
    %299 = vmatprep.subr.mxu0 0.0
    %300 = vmatpush1.msra.mxu0 %v254
    %301 = vmatprep.subr.mxu0 0.0
    %302 = vmatpush1.msra.mxu0 %v253
    %303 = vmatprep.subr.mxu0 0.0
    %304 = vmatpush1.msra.mxu0 %v252
    %305 = vmatprep.subr.mxu0 0.0
    %306 = vmatpush2.msra.mxu0 0.0
    %307 = vmatprep.subr.mxu0 0.0
    %308 = vmatpush2.msra.mxu0 0.0
    %309 = vmatprep.subr.mxu0 0.0
    %310 = vmatpush2.msra.mxu0 0.0
    %311 = vmatprep.subr.mxu0 0.0
    %312 = vmatpush2.msra.mxu0 0.0
    %313 = vmatprep.subr.mxu0 0.0
    %314 = vmatpush2.msra.mxu0 0.0
    %315 = vmatprep.subr.mxu0 0.0
    %316 = vmatpush2.msra.mxu0 0.0
    %317 = vmatprep.subr.mxu0 0.0
    %318 = vmatpush2.msra.mxu0 0.0
    %319 = vmatprep.subr.mxu0 0.0
    %320 = vmatpush2.msra.mxu0 0.0
    %321 = vmatprep.subr.mxu0 0.0
    %322 = vmatpush2.msra.mxu0 0.0
    %323 = vmatprep.subr.mxu0 0.0
    %324 = vmatpush2.msra.mxu0 0.0
    %325 = vmatprep.subr.mxu0 0.0
    %326 = vmatpush2.msra.mxu0 0.0
    %327 = vmatprep.subr.mxu0 0.0
    %328 = vmatpush2.msra.mxu0 0.0
    %329 = vmatprep.subr.mxu0 0.0
    %330 = vmatpush2.msra.mxu0 0.0
    %331 = vmatprep.subr.mxu0 0.0
    %332 = vmatpush2.msra.mxu0 0.0
    %333 = vmatprep.subr.mxu0 0.0
    %334 = vmatpush2.msra.mxu0 0.0
    %335 = vmatprep.subr.mxu0 0.0
    %336 = vmatpush2.msra.mxu0 0.0
    %337 = vmatprep.mubr.f32.mxu0 0.0
    %338 = vmatmul.mubr.f32.gmra.mxu0 %v251
    %v339 = vpop.f32.mrf.mxu0
    %v340 = vadd.f32 %v272, %v339
    %v341 = vpop.f32.mrf.mxu0
    %342 = vdwg.mxu0
    %v343 = vmax.f32 %v340, 0.0
    %v344 = vld [vmem:[#allocation2 + $0x1a8] sm:$0xff]
    %v345 = vld [vmem:[#allocation2 + $0x1b0] sm:$0xff]
    %v346 = vld [vmem:[#allocation2 + $0x1b8] sm:$0xff]
    %v347 = vld [vmem:[#allocation2 + $0x1c0] sm:$0xff]
    %v348 = vld [vmem:[#allocation2 + $0x1c8] sm:$0xff]
    %v349 = vld [vmem:[#allocation2 + $0x1d0] sm:$0xff]
    %v350 = vld [vmem:[#allocation2 + $0x1d8] sm:$0xff]
    %v351 = vld [vmem:[#allocation2 + $0x1e0] sm:$0xff]
    %v352 = vld [vmem:[#allocation2 + $0x1e8] sm:$0xff]
    %v353 = vld [vmem:[#allocation2 + $0x1f0] sm:$0xff]
    %v354 = vld [vmem:[#allocation2 + $0x1f8] sm:$0xff]
    %v355 = vld [vmem:[#allocation2 + $0x200] sm:$0xff]
    %v356 = vld [vmem:[#allocation2 + $0x208] sm:$0xff]
    %v357 = vld [vmem:[#allocation2 + $0x210] sm:$0xff]
    %v358 = vld [vmem:[#allocation2 + $0x218] sm:$0xff]
    %v359 = vld [vmem:[#allocation2 + $0x220] sm:$0xff]
    %v360 = vld [vmem:[#allocation2 + $0x228] sm:$0x1]
    %v361 = vlaneseq
    %v362 = vshrl.u32 %v361, 7
    %v363 = vsub.s32 0, %v362
    %v364 = vrot.slane %v360, %v363
    %365 = vmatprep.subr.mxu0 0.0
    %366 = vmatpush1.msra.mxu0 %v359
    %367 = vmatprep.subr.mxu0 0.0
    %368 = vmatpush1.msra.mxu0 %v358
    %369 = vmatprep.subr.mxu0 0.0
    %370 = vmatpush1.msra.mxu0 %v357
    %371 = vmatprep.subr.mxu0 0.0
    %372 = vmatpush1.msra.mxu0 %v356
    %373 = vmatprep.subr.mxu0 0.0
    %374 = vmatpush1.msra.mxu0 %v355
    %375 = vmatprep.subr.mxu0 0.0
    %376 = vmatpush1.msra.mxu0 %v354
    %377 = vmatprep.subr.mxu0 0.0
    %378 = vmatpush1.msra.mxu0 %v353
    %379 = vmatprep.subr.mxu0 0.0
    %380 = vmatpush1.msra.mxu0 %v352
    %381 = vmatprep.subr.mxu0 0.0
    %382 = vmatpush1.msra.mxu0 %v351
    %383 = vmatprep.subr.mxu0 0.0
    %384 = vmatpush1.msra.mxu0 %v350
    %385 = vmatprep.subr.mxu0 0.0
    %386 = vmatpush1.msra.mxu0 %v349
    %387 = vmatprep.subr.mxu0 0.0
    %388 = vmatpush1.msra.mxu0 %v348
    %389 = vmatprep.subr.mxu0 0.0
    %390 = vmatpush1.msra.mxu0 %v347
    %391 = vmatprep.subr.mxu0 0.0
    %392 = vmatpush1.msra.mxu0 %v346
    %393 = vmatprep.subr.mxu0 0.0
    %394 = vmatpush1.msra.mxu0 %v345
    %395 = vmatprep.subr.mxu0 0.0
    %396 = vmatpush1.msra.mxu0 %v344
    %397 = vmatprep.subr.mxu0 0.0
    %398 = vmatpush2.msra.mxu0 0.0
    %399 = vmatprep.subr.mxu0 0.0
    %400 = vmatpush2.msra.mxu0 0.0
    %401 = vmatprep.subr.mxu0 0.0
    %402 = vmatpush2.msra.mxu0 0.0
    %403 = vmatprep.subr.mxu0 0.0
    %404 = vmatpush2.msra.mxu0 0.0
    %405 = vmatprep.subr.mxu0 0.0
    %406 = vmatpush2.msra.mxu0 0.0
    %407 = vmatprep.subr.mxu0 0.0
    %408 = vmatpush2.msra.mxu0 0.0
    %409 = vmatprep.subr.mxu0 0.0
    %410 = vmatpush2.msra.mxu0 0.0
    %411 = vmatprep.subr.mxu0 0.0
    %412 = vmatpush2.msra.mxu0 0.0
    %413 = vmatprep.subr.mxu0 0.0
    %414 = vmatpush2.msra.mxu0 0.0
    %415 = vmatprep.subr.mxu0 0.0
    %416 = vmatpush2.msra.mxu0 0.0
    %417 = vmatprep.subr.mxu0 0.0
    %418 = vmatpush2.msra.mxu0 0.0
    %419 = vmatprep.subr.mxu0 0.0
    %420 = vmatpush2.msra.mxu0 0.0
    %421 = vmatprep.subr.mxu0 0.0
    %422 = vmatpush2.msra.mxu0 0.0
    %423 = vmatprep.subr.mxu0 0.0
    %424 = vmatpush2.msra.mxu0 0.0
    %425 = vmatprep.subr.mxu0 0.0
    %426 = vmatpush2.msra.mxu0 0.0
    %427 = vmatprep.subr.mxu0 0.0
    %428 = vmatpush2.msra.mxu0 0.0
    %429 = vmatprep.mubr.f32.mxu0 0.0
    %430 = vmatmul.mubr.f32.gmra.mxu0 %v343
    %v431 = vpop.f32.mrf.mxu0
    %v432 = vadd.f32 %v364, %v431
    %v433 = vpop.f32.mrf.mxu0
    %434 = vdwg.mxu0
    %v435 = vmul.f32 %v432, %v432
    %436 = vadd.xlane.f32.xlu0 %v435
    %v437 = vpop.xlane.xlu0 %436
    %v438 = vmax.f32 %v437, 1e-24
    %v439 = vrsqrt.pop %v438
    %v440 = vmul.f32 %v432, %v439
    %441 = vst [vmem:[#allocation5] sm:$0xff] %v440
    // Predicated region
    $region14: #{autoencoder_forward.1} parent=1 // pred_check
      _
    $region15: #{autoencoder_forward.1} parent=1 // pred_check_branch
      %443 = sbr.rel (0) target = $region17
    $region16: #{autoencoder_forward.1} parent=1 // pred_region
      %s445 = ssub.s32 128, 128
      %446 = vsyncadd [#allocation4], %s445
      %s448 = sshll.u32 [#allocation5], 4
      %s449 = int_to_ptr.vmem [resolvable:$true] %s448
      %451 = dma.vmem_to_hbm [thread:$0]  %s449, 128, %s2, [#allocation4]
    $region17: #{autoencoder_forward.1} parent=1 // pred_fallthru
      _
    // Predicated region
    $region18: #{autoencoder_forward.1} parent=1 // pred_check
      _
    $region19: #{autoencoder_forward.1} parent=1 // pred_check_branch
      %453 = sbr.rel (0) target = $region21
    $region20: #{autoencoder_forward.1} parent=1 // pred_region
      %454 = dma.done [#allocation4], 128
    $region21: #{autoencoder_forward.1} parent=1 // pred_fallthru
      _
    %455 = vsyncpa [#allocation3], 1
    %456 = vsyncpa [#allocation4], 1

</llo_original>
